<compile_context>
chip_gen: v6e
topology: v6e:2x2x1
jax: 0.10.0
libtpu: 0.0.40
codegen_flags: <defaults>
</compile_context>

<pallas_src>
import functools

import jax
import jax.numpy as jnp
from jax.experimental import pallas as pl
from jax.experimental.pallas import tpu as pltpu


_LANES = 128
_ACC_SUBLANES = 8                 # f32 vreg sublane count (accumulator rows)
_TARGET_TILE_BYTES = 1 << 20      # ~1 MiB per input tile; x2 pipeline buffers = 2 MiB VMEM


def _cdiv(a: int, b: int) -> int:
    return -(-a // b)


def _round_down(a: int, b: int) -> int:
    return (a // b) * b


def _sum_tiles_kernel(x_ref, out_ref, acc_ref, *, tiles_per_shard: int,
                      tile_rows: int, body_rows: int, needs_mask: bool):
    """Accumulate per-tile row-group sums into an (8,128) f32 scratch; one partial per shard."""
    i = pl.program_id(1)  # tile index within this shard ("arbitrary" reduction axis)

    @pl.when(i == 0)
    def _init():
        acc_ref[...] = jnp.zeros_like(acc_ref)

    x = x_ref[...].astype(jnp.float32)
    if needs_mask:
        # Partial / duplicated edge tiles: zero rows past the valid body.
        row0 = (pl.program_id(0) * tiles_per_shard + i) * tile_rows
        rows = jax.lax.broadcasted_iota(jnp.int32, (tile_rows, _LANES), 0) + row0
        x = jnp.where(rows < body_rows, x, 0.0)

    # Pure-VPU accumulation: fold row-groups of 8 into the vreg-shaped accumulator.
    acc_ref[...] += jnp.sum(
        x.reshape(tile_rows // _ACC_SUBLANES, _ACC_SUBLANES, _LANES), axis=0)

    @pl.when(i == tiles_per_shard - 1)
    def _finalize():
        out_ref[0] = acc_ref[...]


def _lane_dense_body_sum(body):
    """f32 sum of a lane-dense (rows, 128) array via a tiled, pipelined Pallas reduction."""
    body_rows = body.shape[0]
    itemsize = body.dtype.itemsize
    gran = max(_ACC_SUBLANES, 32 // itemsize)          # dtype-aware sublane granularity
    max_tile_rows = max(gran, _round_down(_TARGET_TILE_BYTES // (_LANES * itemsize), gran))
    tile_rows = min(max_tile_rows, body_rows)
    tiles_total = _cdiv(body_rows, tile_rows)

    # Leading "parallel" shard axis: lets v7x spread DMA + reduction over its two
    # TensorCores; on v5e/v6e (1 TC) it simply runs sequentially at no extra cost.
    num_shards = 2 if tiles_total >= 2 else 1
    tiles_per_shard = _cdiv(tiles_total, num_shards)
    grid_tiles = num_shards * tiles_per_shard
    needs_mask = grid_tiles * tile_rows != body_rows

    kernel = functools.partial(
        _sum_tiles_kernel, tiles_per_shard=tiles_per_shard, tile_rows=tile_rows,
        body_rows=body_rows, needs_mask=needs_mask)

    def x_map(s, i):
        idx = s * tiles_per_shard + i
        if needs_mask:
            idx = jnp.minimum(idx, tiles_total - 1)     # never DMA a fully-OOB block
        return (idx, 0)

    partials = pl.pallas_call(
        kernel,
        out_shape=jax.ShapeDtypeStruct((num_shards, _ACC_SUBLANES, _LANES), jnp.float32),
        grid_spec=pltpu.PrefetchScalarGridSpec(
            num_scalar_prefetch=0,
            grid=(num_shards, tiles_per_shard),
            in_specs=[pl.BlockSpec((tile_rows, _LANES), x_map)],
            out_specs=pl.BlockSpec((1, _ACC_SUBLANES, _LANES), lambda s, i: (s, 0, 0)),
            scratch_shapes=[pltpu.VMEM((_ACC_SUBLANES, _LANES), jnp.float32)],
        ),
        compiler_params=pltpu.CompilerParams(
            dimension_semantics=("parallel", "arbitrary")),
        cost_estimate=pl.CostEstimate(
            flops=grid_tiles * tile_rows * _LANES,
            transcendentals=0,
            bytes_accessed=(grid_tiles * tile_rows * _LANES * itemsize
                            + num_shards * _ACC_SUBLANES * _LANES * 4)),
    )(body)
    return jnp.sum(partials)


def _array_sum_f32(x):
    """float32 sum of all elements: Pallas kernel for the lane-aligned body + XLA tail."""
    flat = x.reshape(-1)
    n = flat.shape[0]
    gran = max(_ACC_SUBLANES, 32 // flat.dtype.itemsize)
    chunk = gran * _LANES
    body_rows = (n // chunk) * gran
    body_elems = body_rows * _LANES

    total = jnp.float32(0.0)
    if body_rows > 0:
        # When n is a multiple of the lane chunk this is a pure reshape (no HBM copy);
        # otherwise only the aligned prefix is sliced off (no full padded copy).
        body = flat if body_elems == n else flat[:body_elems]
        total = total + _lane_dense_body_sum(body.reshape(body_rows, _LANES))
    if body_elems < n:
        # Ragged tail (< gran*128 elements): summed on the XLA side, folded in here.
        total = total + jnp.sum(flat[body_elems:].astype(jnp.float32))
    return total


def wdisc_loss(d_real_prediction, d_fake_prediction, penalty,
               penalty_lambda: float = 10.0, *, min_pallas_elements: int = 32768):
    """Pallas implementation of WDiscLoss.forward. Returns a scalar float32 loss.

    NOTE: single-pass f32 accumulation; for >1e8-element inputs a pairwise/mean-of-means
    reduction would be slightly more accurate.
    """
    d_real = jnp.asarray(d_real_prediction)
    d_fake = jnp.asarray(d_fake_prediction)
    pen = jnp.asarray(penalty).astype(jnp.float32)
    lam = jnp.float32(penalty_lambda)

    n_real = int(d_real.size)
    n_fake = int(d_fake.size)

    # Small-size fast path: for typical (B, 1) critic outputs the pallas_call launch
    # overhead dominates; plain XLA is already at the HBM roofline there. Also covers
    # empty inputs (mean of empty -> nan, matching torch semantics) without a 1/0.
    if n_real == 0 or n_fake == 0 or (n_real + n_fake) < min_pallas_elements:
        return (jnp.mean(d_fake.astype(jnp.float32))
                - jnp.mean(d_real.astype(jnp.float32))
                + lam * pen)

    mean_fake = _array_sum_f32(d_fake) / jnp.float32(n_fake)
    mean_real = _array_sum_f32(d_real) / jnp.float32(n_real)
    return mean_fake - mean_real + lam * pen


if __name__ == "__main__":
    key = jax.random.PRNGKey(0)
    k1, k2, k3, k4, k5 = jax.random.split(key, 5)

    # 1) Typical critic outputs (batch, 1): small-size fast path (pure XLA).
    d_real = jax.random.normal(k1, (8, 1), dtype=jnp.float32)
    d_fake = jax.random.normal(k2, (8, 1), dtype=jnp.float32)
    penalty = jax.random.uniform(k3, (), dtype=jnp.float32)
    loss = jax.block_until_ready(wdisc_loss(d_real, d_fake, penalty, 10.0))
    ref = jnp.mean(d_fake) - jnp.mean(d_real) + 10.0 * penalty
    assert jnp.allclose(loss, ref, rtol=1e-5, atol=1e-5), (loss, ref)

    # 2) Force the Pallas path on a small lane-aligned input (single tile, one shard).
    s_real = jax.random.normal(k4, (256, 8), dtype=jnp.float32)    # 2048 elems -> (16, 128) body
    s_fake = jax.random.normal(k5, (256, 8), dtype=jnp.float32)
    loss_s = jax.block_until_ready(
        wdisc_loss(s_real, s_fake, penalty, 10.0, min_pallas_elements=0))
    ref_s = jnp.mean(s_fake) - jnp.mean(s_real) + 10.0 * penalty
    assert jnp.allclose(loss_s, ref_s, rtol=1e-5, atol=1e-5), (loss_s, ref_s)

    # 3) Multi-tile, two-shard, ragged path (partial last tile masked + XLA tail sum).
    kb1, kb2 = jax.random.split(jax.random.PRNGKey(1))
    b_real = jax.random.normal(kb1, (2309, 127), dtype=jnp.float32)
    b_fake = jax.random.normal(kb2, (2309, 127), dtype=jnp.float32)
    loss_b = jax.block_until_ready(wdisc_loss(b_real, b_fake, penalty, 10.0))
    ref_b = jnp.mean(b_fake) - jnp.mean(b_real) + 10.0 * penalty
    assert jnp.allclose(loss_b, ref_b, rtol=1e-4, atol=1e-4), (loss_b, ref_b)

    print("KERNEL_OK")
</pallas_src>

<mosaic_0001>
module attributes {stable_mosaic.version = 11 : i64} {
  func.func @_sum_tiles_kernel(%arg0: i32, %arg1: i32, %arg2: memref<16x128xf32, #tpu.memory_space<vmem>>, %arg3: memref<1x8x128xf32, #tpu.memory_space<vmem>>, %arg4: memref<8x128xf32, #tpu.memory_space<vmem>>) attributes {dimension_semantics = [#tpu.dimension_semantics<parallel>, #tpu.dimension_semantics<arbitrary>], iteration_bounds = array<i64: 1, 1>, scalar_prefetch = 0 : i64, scratch_operands = 1 : i64, tpu.core_type = #tpu.core_type<tc>, window_params = [{transform_indices = @transform_0, window_bounds = array<i64: 16, 128>}, {transform_indices = @transform_1, window_bounds = array<i64: 1, 8, 128>}]} {
    %c0_i32 = arith.constant 0 : i32
    %0 = arith.cmpi eq, %arg1, %c0_i32 : i32
    %1 = arith.extui %0 : i1 to i32
    %c0_i32_0 = arith.constant 0 : i32
    %2 = arith.cmpi ne, %1, %c0_i32_0 : i32
    scf.if %2 {
      %cst_8 = arith.constant 0.000000e+00 : f32
      %12 = vector.broadcast %cst_8 : f32 to vector<8x128xf32>
      %c0_9 = arith.constant 0 : index
      %c0_10 = arith.constant 0 : index
      %13 = vector.load %arg4[%c0_9, %c0_10] : memref<8x128xf32, #tpu.memory_space<vmem>>, vector<8x128xf32>
      tpu.vector_store %arg4[%c0_9, %c0_10], %12 {strides = array<i32>} : memref<8x128xf32, #tpu.memory_space<vmem>>, vector<8x128xf32>,
    } else {
    }
    %c0 = arith.constant 0 : index
    %c0_1 = arith.constant 0 : index
    %3 = vector.load %arg2[%c0, %c0_1] : memref<16x128xf32, #tpu.memory_space<vmem>>, vector<16x128xf32>
    %c0_2 = arith.constant 0 : index
    %c0_3 = arith.constant 0 : index
    %4 = vector.load %arg4[%c0_2, %c0_3] : memref<8x128xf32, #tpu.memory_space<vmem>>, vector<8x128xf32>
    %5 = vector.shape_cast %3 : vector<16x128xf32> to vector<2x8x128xf32>
    %cst = arith.constant dense<0.000000e+00> : vector<8x128xf32>
    %6 = vector.multi_reduction <add>, %5, %cst [0] : vector<2x8x128xf32> to vector<8x128xf32>
    %7 = arith.addf %4, %6 : vector<8x128xf32>
    %c0_4 = arith.constant 0 : index
    %c0_5 = arith.constant 0 : index
    %8 = vector.load %arg4[%c0_4, %c0_5] : memref<8x128xf32, #tpu.memory_space<vmem>>, vector<8x128xf32>
    tpu.vector_store %arg4[%c0_4, %c0_5], %7 {strides = array<i32>} : memref<8x128xf32, #tpu.memory_space<vmem>>, vector<8x128xf32>,
    %c0_i32_6 = arith.constant 0 : i32
    %9 = arith.cmpi eq, %arg1, %c0_i32_6 : i32
    %10 = arith.extui %9 : i1 to i32
    %c0_i32_7 = arith.constant 0 : i32
    %11 = arith.cmpi ne, %10, %c0_i32_7 : i32
    scf.if %11 {
      %c0_8 = arith.constant 0 : index
      %c0_9 = arith.constant 0 : index
      %12 = vector.load %arg4[%c0_8, %c0_9] : memref<8x128xf32, #tpu.memory_space<vmem>>, vector<8x128xf32>
      %c0_10 = arith.constant 0 : index
      %c0_11 = arith.constant 0 : index
      %c0_12 = arith.constant 0 : index
      %13 = vector.load %arg3[%c0_10, %c0_11, %c0_12] : memref<1x8x128xf32, #tpu.memory_space<vmem>>, vector<1x8x128xf32>
      %14 = vector.shape_cast %13 : vector<1x8x128xf32> to vector<8x128xf32>
      %15 = vector.shape_cast %12 : vector<8x128xf32> to vector<1x8x128xf32>
      tpu.vector_store %arg3[%c0_10, %c0_11, %c0_12], %15 {strides = array<i32>} : memref<1x8x128xf32, #tpu.memory_space<vmem>>, vector<1x8x128xf32>,
    } else {
    }
    return
  }
  func.func @transform_0(%arg0: i32, %arg1: i32) -> (i32, i32) {
    %c1_i32 = arith.constant 1 : i32
    %0 = arith.muli %arg0, %c1_i32 : i32
    %1 = arith.addi %0, %arg1 : i32
    %c0_i32 = arith.constant 0 : i32
    %c0_i32_0 = arith.constant 0 : i32
    return %1, %c0_i32 : i32, i32
  }
  func.func @transform_1(%arg0: i32, %arg1: i32) -> (i32, i32, i32) {
    %c0_i32 = arith.constant 0 : i32
    %c0_i32_0 = arith.constant 0 : i32
    %c0_i32_1 = arith.constant 0 : i32
    return %arg0, %c0_i32, %c0_i32_0 : i32, i32, i32
  }
}

</mosaic_0001>

<llo_original>
// kernel: tpu_custom_call.1
$region0: #{tpu_custom_call.1}
  #allocation0 [shape = 'u32[]', space=smem, size = 0x4, offset = 0x4, fixed_abs, tag = 'smem constant byte address 0x4 - core index']
  #allocation1 [shape = 'u32[144,128]{1,0:T(1,128)}', space=vmem, size = 0x12000, scoped, tag = 'internal scratch']
  #allocation2 [shape = 'f32[8,128]{1,0:T(8,128)}', space=vmem, size = 0x1000, scoped, tag = 'scratch operand']
  %s0 = inlined_call_operand.hbm [shape: f32[16,128], index: 0, kind: input, shape index: {}]
  %s1 = inlined_call_operand.hbm [shape: f32[1,8,128], index: 1, kind: output, shape index: {}]
  %s2 = sld [smem:[#allocation0]]
  $region26: #{tpu_custom_call.1} parent=0
    _
  %s4 = ssub.s32 1, %s2
  %s5 = scalar_select 0, %s4, %s2
  $region1: #{tpu_custom_call.1} parent=0
    #allocation3 [shape = 'u8[8192]{0}', space=vmem, size = 0x2000, scoped, tag = 'input window, operand 0, single buffered']
    #allocation4 [shape = 's32[1]{0}', space=sflag, size = 0x4, scoped, tag = 'scoped memory for tpu_custom_call.1']
    #allocation5 [shape = 's32[1]{0}', space=sflag, size = 0x4, scoped, tag = 'scoped memory for tpu_custom_call.1']
    #allocation6 [shape = 'u8[4096]{0}', space=vmem, size = 0x1000, scoped, tag = 'output window, operand 0, single buffered']
    %6 = vsyncpa [#allocation4], 0
    %7 = vsyncpa [#allocation5], 0
    // Predicated region
    $region2: #{tpu_custom_call.1} parent=1 // pred_check
      _
    $region3: #{tpu_custom_call.1} parent=1 // pred_check_branch
      %9 = sbr.rel (0) target = $region5
    $region4: #{tpu_custom_call.1} parent=1 // pred_region
      %s10 = sadd.s32 0, 0
      %s11 = smul.u32 2, %s10
      %s13 = ssub.s32 256, 256
      %14 = vsyncadd [#allocation4], %s13
      %s15 = smul.addr %s11, 128
      %s16 = scalar_lea.hbm %s0, %s15
      %s17 = sshll.u32 [#allocation3], 4
      %s18 = int_to_ptr.vmem [resolvable:$true] %s17
      %23 = dma.hbm_to_vmem [thread:$0]  %s16, 256, %s18, [#allocation4], 128, 128, 8
    $region5: #{tpu_custom_call.1} parent=1 // pred_fallthru
      _
    // Predicated region
    $region6: #{tpu_custom_call.1} parent=1 // pred_check
      _
    $region7: #{tpu_custom_call.1} parent=1 // pred_check_branch
      %25 = sbr.rel (0) target = $region9
    $region8: #{tpu_custom_call.1} parent=1 // pred_region
      %26 = dma.done [#allocation4], 256
    $region9: #{tpu_custom_call.1} parent=1 // pred_fallthru
      _
    %s27 = sadd.s32 0, 0
    %s28 = smul.u32 2, %s27
    %p29 = scmp.eq.s32.totalorder 0, 0
    // Predicated region
    $region10: #{tpu_custom_call.1} parent=1 // pred_check
      %p30 = pneg %p29
    $region11: #{tpu_custom_call.1} parent=1 // pred_check_branch
      %32 = sbr.rel (%p30) target = $region13
    $region12: #{tpu_custom_call.1} parent=1 // pred_region
      %33 = vst [vmem:[#allocation2] sm:$0xff] 0.0
    $region13: #{tpu_custom_call.1} parent=1 // pred_fallthru
      _
    %v34 = vld [vmem:[#allocation3] sm:$0xff]
    %v35 = vld [vmem:[#allocation3 + $0x8] sm:$0xff]
    %v36 = vld [vmem:[#allocation2] sm:$0xff]
    %v37 = vadd.f32 %v34, %v35
    %v38 = vadd.f32 %v36, %v37
    %39 = vst [vmem:[#allocation2] sm:$0xff] %v38
    // Predicated region
    $region14: #{tpu_custom_call.1} parent=1 // pred_check
      %p40 = pneg %p29
    $region15: #{tpu_custom_call.1} parent=1 // pred_check_branch
      %42 = sbr.rel (%p40) target = $region17
    $region16: #{tpu_custom_call.1} parent=1 // pred_region
      %v43 = vld [vmem:[#allocation2] sm:$0xff]
      %44 = vst [vmem:[#allocation6] sm:$0xff] %v43
    $region17: #{tpu_custom_call.1} parent=1 // pred_fallthru
      _
    // Predicated region
    $region18: #{tpu_custom_call.1} parent=1 // pred_check
      _
    $region19: #{tpu_custom_call.1} parent=1 // pred_check_branch
      %46 = sbr.rel (0) target = $region21
    $region20: #{tpu_custom_call.1} parent=1 // pred_region
      %s48 = ssub.s32 128, 128
      %49 = vsyncadd [#allocation5], %s48
      %s51 = sshll.u32 [#allocation6], 4
      %s52 = int_to_ptr.vmem [resolvable:$true] %s51
      %54 = dma.vmem_to_hbm [thread:$0]  %s52, 128, %s1, [#allocation5]
    $region21: #{tpu_custom_call.1} parent=1 // pred_fallthru
      _
    // Predicated region
    $region22: #{tpu_custom_call.1} parent=1 // pred_check
      _
    $region23: #{tpu_custom_call.1} parent=1 // pred_check_branch
      %56 = sbr.rel (0) target = $region25
    $region24: #{tpu_custom_call.1} parent=1 // pred_region
      %57 = dma.done [#allocation5], 128
    $region25: #{tpu_custom_call.1} parent=1 // pred_fallthru
      _
    %58 = vsyncpa [#allocation4], 1
    %59 = vsyncpa [#allocation5], 1

</llo_original>
